<compile_context>
chip_gen: v6e
topology: v6e:2x2x1
jax: 0.10.0
libtpu: 0.0.40
codegen_flags: <defaults>
</compile_context>

<pallas_src>
import jax
import jax.numpy as jnp
from jax.experimental import pallas as pl
from jax.experimental.pallas import tpu as pltpu


BN_EPS = 1e-5


def _round_up(n, m):
    return ((n + m - 1) // m) * m


def head_kernel(x_ref, w1_ref, b1_ref, w2_ref, b2_ref, out_ref):
    # fc1 with eval-mode BN pre-folded into (w1, b1); bf16 operands, f32 accumulation.
    x = x_ref[...]
    if x.dtype != jnp.bfloat16:
        x = x.astype(jnp.bfloat16)
    h = jnp.dot(x, w1_ref[...], preferred_element_type=jnp.float32) + b1_ref[...]
    # ReLU; Dropout (eval mode) == identity.
    # TODO(synk): training-mode dropout RNG masking / batch-stat BN not implemented (eval only).
    h = jnp.maximum(h, 0.0)
    # classifier
    out = jnp.dot(h.astype(jnp.bfloat16), w2_ref[...],
                  preferred_element_type=jnp.float32) + b2_ref[...]
    out_ref[...] = out.astype(out_ref.dtype)


def prepare_params(params, *, eps=BN_EPS):
    """One-time constant fold: BN(eval) into fc1, bf16 weights, lane-pad classifier."""
    w1, b1 = params["w1"], params["b1"]
    gamma, beta = params["gamma"], params["beta"]
    mean, var = params["running_mean"], params["running_var"]
    w2, b2 = params["w2"], params["b2"]
    C = w2.shape[1]

    scale = gamma * jax.lax.rsqrt(var + eps)                 # (1, BN)
    w1_f = (w1 * scale).astype(jnp.bfloat16)                 # fold BN scale into fc1 weight
    b1_f = ((b1 - mean) * scale + beta).astype(jnp.float32)  # fold BN shift into fc1 bias

    C_pad = _round_up(C, 128)                                # lane-dense output width
    if C_pad != C:
        w2 = jnp.pad(w2, ((0, 0), (0, C_pad - C)))
        b2 = jnp.pad(b2, ((0, 0), (0, C_pad - C)))

    return dict(w1=w1_f, b1=b1_f,
                w2=w2.astype(jnp.bfloat16), b2=b2.astype(jnp.float32),
                num_classes=C)


def modified_head_forward(x, prepared, *, block_b=None, out_dtype=jnp.float32,
                          return_padded=False):
    """x: (B, D_in), ideally bf16 straight from the backbone (f32 also accepted).

    return_padded=True returns the raw (B_pad, C_pad) kernel output so the consumer can
    slice/fuse it (padded rows / class columns contain garbage / zeros respectively).
    """
    B, D_in = x.shape
    w1, b1, w2, b2 = prepared["w1"], prepared["b1"], prepared["w2"], prepared["b2"]
    BN = w1.shape[1]
    C_pad = w2.shape[1]
    C = prepared["num_classes"]

    # Batch tile: sublane-aligned (16 for packed bf16 rows), capped at 512; pick ceil(B/2)
    # when that is below the cap so the batch grid has >= 2 steps and the "parallel" axis
    # can shard across both v7x TensorCores.
    align = 16 if x.dtype == jnp.bfloat16 else 8
    if block_b is None:
        TB = min(512, max(align, _round_up((B + 1) // 2, align)))
    else:
        TB = block_b
    TB = _round_up(TB, align)
    B_pad = _round_up(B, TB)
    if B_pad != B:
        x = jnp.pad(x, ((0, B_pad - B), (0, 0)))

    grid = (B_pad // TB,)

    x_bytes = x.dtype.itemsize
    out_bytes = jnp.dtype(out_dtype).itemsize

    # Advisory cost estimate so XLA can overlap the backbone with this head.
    flops = 2 * B_pad * (D_in * BN + BN * C_pad)
    bytes_accessed = (B_pad * D_in * x_bytes
                      + w1.size * w1.dtype.itemsize + w2.size * w2.dtype.itemsize
                      + b1.size * 4 + b2.size * 4
                      + B_pad * C_pad * out_bytes)

    # Generation-aware VMEM clamp: <=32 MiB on 64 MiB-VMEM chips (v7x), <=48 MiB otherwise.
    try:
        vmem_cap = pltpu.get_tpu_info().vmem_capacity_bytes
    except Exception:
        vmem_cap = 128 << 20
    hard_cap = (32 << 20) if vmem_cap <= (64 << 20) else (48 << 20)

    def _run(single_buffer_weights):
        # Double-buffered activation/output tiles; weights single-buffered when supported.
        weight_mult = 1 if single_buffer_weights else 2
        weight_bytes = (w1.size * w1.dtype.itemsize + w2.size * w2.dtype.itemsize
                        + b1.size * 4 + b2.size * 4)
        vmem_bytes = (2 * (TB * D_in * x_bytes + TB * C_pad * out_bytes)
                      + weight_mult * weight_bytes + (2 << 20))
        vmem_limit = int(min(max(vmem_bytes, 4 << 20), hard_cap))

        def const_spec(shape):
            # Constant index map -> block never changes; one buffer is enough.
            if single_buffer_weights:
                return pl.BlockSpec(shape, lambda i: (0, 0),
                                    pipeline_mode=pl.Buffered(1))
            return pl.BlockSpec(shape, lambda i: (0, 0))

        return pl.pallas_call(
            head_kernel,
            out_shape=jax.ShapeDtypeStruct((B_pad, C_pad), out_dtype),
            grid=grid,
            in_specs=[
                pl.BlockSpec((TB, D_in), lambda i: (i, 0)),  # activation tile (pipelined)
                const_spec((D_in, BN)),                      # fc1 weight (VMEM-resident)
                const_spec((1, BN)),                         # fused fc1/BN bias
                const_spec((BN, C_pad)),                     # classifier weight (resident)
                const_spec((1, C_pad)),                      # classifier bias
            ],
            out_specs=pl.BlockSpec((TB, C_pad), lambda i: (i, 0)),
            compiler_params=pltpu.CompilerParams(
                dimension_semantics=("parallel",),
                vmem_limit_bytes=vmem_limit,
            ),
            cost_estimate=pl.CostEstimate(flops=flops, transcendentals=0,
                                          bytes_accessed=bytes_accessed),
        )(x, w1, b1, w2, b2)

    try:
        out = _run(True)          # single-buffered constant weights
    except Exception:
        out = _run(False)         # fallback if pipeline_mode=Buffered(1) unsupported

    if return_padded:
        return out
    return out[:B, :C]


def init_params(key, backbone_output_size, bottle_neck, num_classes):
    """Deterministic parameter init mirroring the PyTorch init functions."""
    k1, k2, k3 = jax.random.split(key, 3)
    # fc1: weights_init_classifier -> normal(std=0.001), bias 0
    w1 = 0.001 * jax.random.normal(k1, (backbone_output_size, bottle_neck), jnp.float32)
    b1 = jnp.zeros((1, bottle_neck), jnp.float32)
    # bn: weights_init_kaiming (BatchNorm1d branch) -> weight ~ N(1, 0.02), bias 0
    gamma = 1.0 + 0.02 * jax.random.normal(k2, (1, bottle_neck), jnp.float32)
    beta = jnp.zeros((1, bottle_neck), jnp.float32)
    running_mean = jnp.zeros((1, bottle_neck), jnp.float32)
    running_var = jnp.ones((1, bottle_neck), jnp.float32)
    # classifier: weights_init_classifier -> normal(std=0.001), bias 0
    w2 = 0.001 * jax.random.normal(k3, (bottle_neck, num_classes), jnp.float32)
    b2 = jnp.zeros((1, num_classes), jnp.float32)
    return dict(w1=w1, b1=b1, gamma=gamma, beta=beta,
                running_mean=running_mean, running_var=running_var,
                w2=w2, b2=b2)


if __name__ == "__main__":
    # Small shapes consistent with the module (backbone features -> bottleneck -> classes).
    # NUM_CLASSES deliberately not a multiple of 128 to exercise the lane-padding path
    # (the real model uses 2048 -> 128 -> 576).
    BATCH = 24
    BACKBONE = 256
    BOTTLE_NECK = 128
    NUM_CLASSES = 200

    key = jax.random.PRNGKey(0)
    kx, kp = jax.random.split(key)
    # Producer emits bf16 activations (backbone epilogue dtype) -> halves the dominant DMA.
    x = jax.random.normal(kx, (BATCH, BACKBONE), jnp.float32).astype(jnp.bfloat16)
    params = init_params(kp, BACKBONE, BOTTLE_NECK, NUM_CLASSES)
    prepared = prepare_params(params)

    # Auto TB -> 16 here: batch padded 24->32, 2 grid steps (exercises pipelining, padding,
    # and the >=2-step megacore split).  Consume the padded buffer and slice at the consumer.
    out_padded = modified_head_forward(x, prepared, return_padded=True)
    jax.block_until_ready(out_padded)
    out = out_padded[:BATCH, :NUM_CLASSES]

    # Pure-JAX f32 reference (unfused eval-mode BN with running stats).
    x_f32 = x.astype(jnp.float32)
    h_ref = x_f32 @ params["w1"] + params["b1"]
    h_ref = (h_ref - params["running_mean"]) * (
        params["gamma"] / jnp.sqrt(params["running_var"] + BN_EPS)) + params["beta"]
    h_ref = jnp.maximum(h_ref, 0.0)
    out_ref = h_ref @ params["w2"] + params["b2"]

    assert out.shape == out_ref.shape, (out.shape, out_ref.shape)
    # bf16 operands / f32 accumulation -> looser tolerance than pure f32.
    assert jnp.allclose(out, out_ref, atol=1e-4, rtol=2e-2), (
        "mismatch vs reference, max abs diff = "
        f"{float(jnp.max(jnp.abs(out - out_ref)))}")

    print("KERNEL_OK")
</pallas_src>

<mosaic_0001>
module attributes {stable_mosaic.version = 11 : i64} {
  func.func @head_kernel(%arg0: i32, %arg1: memref<16x256xbf16, #tpu.memory_space<vmem>>, %arg2: memref<256x128xbf16, #tpu.memory_space<vmem>>, %arg3: memref<1x128xf32, #tpu.memory_space<vmem>>, %arg4: memref<128x256xbf16, #tpu.memory_space<vmem>>, %arg5: memref<1x256xf32, #tpu.memory_space<vmem>>, %arg6: memref<16x256xf32, #tpu.memory_space<vmem>>) attributes {dimension_semantics = [#tpu.dimension_semantics<parallel>], iteration_bounds = array<i64: 2>, scalar_prefetch = 0 : i64, scratch_operands = 0 : i64, tpu.core_type = #tpu.core_type<tc>, window_params = [{transform_indices = @transform_0, window_bounds = array<i64: 16, 256>}, {pipeline_mode = #tpu.pipeline_mode<synchronous>, transform_indices = @transform_1, window_bounds = array<i64: 256, 128>}, {pipeline_mode = #tpu.pipeline_mode<synchronous>, transform_indices = @transform_2, window_bounds = array<i64: 1, 128>}, {pipeline_mode = #tpu.pipeline_mode<synchronous>, transform_indices = @transform_3, window_bounds = array<i64: 128, 256>}, {pipeline_mode = #tpu.pipeline_mode<synchronous>, transform_indices = @transform_4, window_bounds = array<i64: 1, 256>}, {transform_indices = @transform_5, window_bounds = array<i64: 16, 256>}]} {
    %c0 = arith.constant 0 : index
    %c0_0 = arith.constant 0 : index
    %0 = vector.load %arg1[%c0, %c0_0] : memref<16x256xbf16, #tpu.memory_space<vmem>>, vector<16x256xbf16>
    %c0_1 = arith.constant 0 : index
    %c0_2 = arith.constant 0 : index
    %1 = vector.load %arg2[%c0_1, %c0_2] : memref<256x128xbf16, #tpu.memory_space<vmem>>, vector<256x128xbf16>
    %cst = arith.constant dense<0.000000e+00> : vector<16x128xf32>
    %2 = tpu.matmul %0, %1, %cst {dimension_numbers = #tpu.dot_dimension_numbers<[1], [0], [0], [1], [0, 0, 1, 1], [], []>} : vector<16x256xbf16>, vector<256x128xbf16>, vector<16x128xf32> -> vector<16x128xf32>
    %c0_3 = arith.constant 0 : index
    %c0_4 = arith.constant 0 : index
    %3 = vector.load %arg3[%c0_3, %c0_4] : memref<1x128xf32, #tpu.memory_space<vmem>>, vector<1x128xf32>
    %4 = vector.broadcast %3 : vector<1x128xf32> to vector<16x128xf32>
    %5 = arith.addf %2, %4 : vector<16x128xf32>
    %cst_5 = arith.constant 0.000000e+00 : f32
    %6 = vector.broadcast %cst_5 : f32 to vector<16x128xf32>
    %7 = arith.maximumf %5, %6 : vector<16x128xf32>
    %8 = arith.truncf %7 : vector<16x128xf32> to vector<16x128xbf16>
    %c0_6 = arith.constant 0 : index
    %c0_7 = arith.constant 0 : index
    %9 = vector.load %arg4[%c0_6, %c0_7] : memref<128x256xbf16, #tpu.memory_space<vmem>>, vector<128x256xbf16>
    %cst_8 = arith.constant dense<0.000000e+00> : vector<16x256xf32>
    %10 = tpu.matmul %8, %9, %cst_8 {dimension_numbers = #tpu.dot_dimension_numbers<[1], [0], [0], [1], [0, 0, 1, 1], [], []>} : vector<16x128xbf16>, vector<128x256xbf16>, vector<16x256xf32> -> vector<16x256xf32>
    %c0_9 = arith.constant 0 : index
    %c0_10 = arith.constant 0 : index
    %11 = vector.load %arg5[%c0_9, %c0_10] : memref<1x256xf32, #tpu.memory_space<vmem>>, vector<1x256xf32>
    %12 = vector.broadcast %11 : vector<1x256xf32> to vector<16x256xf32>
    %13 = arith.addf %10, %12 : vector<16x256xf32>
    %c0_11 = arith.constant 0 : index
    %c0_12 = arith.constant 0 : index
    %14 = vector.load %arg6[%c0_11, %c0_12] : memref<16x256xf32, #tpu.memory_space<vmem>>, vector<16x256xf32>
    tpu.vector_store %arg6[%c0_11, %c0_12], %13 {strides = array<i32>} : memref<16x256xf32, #tpu.memory_space<vmem>>, vector<16x256xf32>,
    return
  }
  func.func @transform_0(%arg0: i32) -> (i32, i32) {
    %c0_i32 = arith.constant 0 : i32
    %c0_i32_0 = arith.constant 0 : i32
    return %arg0, %c0_i32 : i32, i32
  }
  func.func @transform_1(%arg0: i32) -> (i32, i32) {
    %c0_i32 = arith.constant 0 : i32
    %c0_i32_0 = arith.constant 0 : i32
    %c0_i32_1 = arith.constant 0 : i32
    return %c0_i32, %c0_i32_0 : i32, i32
  }
  func.func @transform_2(%arg0: i32) -> (i32, i32) {
    %c0_i32 = arith.constant 0 : i32
    %c0_i32_0 = arith.constant 0 : i32
    %c0_i32_1 = arith.constant 0 : i32
    return %c0_i32, %c0_i32_0 : i32, i32
  }
  func.func @transform_3(%arg0: i32) -> (i32, i32) {
    %c0_i32 = arith.constant 0 : i32
    %c0_i32_0 = arith.constant 0 : i32
    %c0_i32_1 = arith.constant 0 : i32
    return %c0_i32, %c0_i32_0 : i32, i32
  }
  func.func @transform_4(%arg0: i32) -> (i32, i32) {
    %c0_i32 = arith.constant 0 : i32
    %c0_i32_0 = arith.constant 0 : i32
    %c0_i32_1 = arith.constant 0 : i32
    return %c0_i32, %c0_i32_0 : i32, i32
  }
  func.func @transform_5(%arg0: i32) -> (i32, i32) {
    %c0_i32 = arith.constant 0 : i32
    %c0_i32_0 = arith.constant 0 : i32
    return %arg0, %c0_i32 : i32, i32
  }
}

module attributes {stable_mosaic.version = 11 : i64} {
  func.func @head_kernel(%arg0: i32, %arg1: memref<16x256xbf16, #tpu.memory_space<vmem>>, %arg2: memref<256x128xbf16, #tpu.memory_space<vmem>>, %arg3: memref<1x128xf32, #tpu.memory_space<vmem>>, %arg4: memref<128x256xbf16, #tpu.memory_space<vmem>>, %arg5: memref<1x256xf32, #tpu.memory_space<vmem>>, %arg6: memref<16x256xf32, #tpu.memory_space<vmem>>) attributes {dimension_semantics = [#tpu.dimension_semantics<parallel>], iteration_bounds = array<i64: 2>, scalar_prefetch = 0 : i64, scratch_operands = 0 : i64, tpu.core_type = #tpu.core_type<tc>, window_params = [{transform_indices = @transform_0, window_bounds = array<i64: 16, 256>}, {pipeline_mode = #tpu.pipeline_mode<synchronous>, transform_indices = @transform_1, window_bounds = array<i64: 256, 128>}, {pipeline_mode = #tpu.pipeline_mode<synchronous>, transform_indices = @transform_2, window_bounds = array<i64: 1, 128>}, {pipeline_mode = #tpu.pipeline_mode<synchronous>, transform_indices = @transform_3, window_bounds = array<i64: 128, 256>}, {pipeline_mode = #tpu.pipeline_mode<synchronous>, transform_indices = @transform_4, window_bounds = array<i64: 1, 256>}, {transform_indices = @transform_5, window_bounds = array<i64: 16, 256>}]} {
    %c0 = arith.constant 0 : index
    %c0_0 = arith.constant 0 : index
    %0 = vector.load %arg1[%c0, %c0_0] : memref<16x256xbf16, #tpu.memory_space<vmem>>, vector<16x256xbf16>
    %c0_1 = arith.constant 0 : index
    %c0_2 = arith.constant 0 : index
    %1 = vector.load %arg2[%c0_1, %c0_2] : memref<256x128xbf16, #tpu.memory_space<vmem>>, vector<256x128xbf16>
    %cst = arith.constant dense<0.000000e+00> : vector<16x128xf32>
    %2 = tpu.matmul %0, %1, %cst {dimension_numbers = #tpu.dot_dimension_numbers<[1], [0], [0], [1], [0, 0, 1, 1], [], []>} : vector<16x256xbf16>, vector<256x128xbf16>, vector<16x128xf32> -> vector<16x128xf32>
    %c0_3 = arith.constant 0 : index
    %c0_4 = arith.constant 0 : index
    %3 = vector.load %arg3[%c0_3, %c0_4] : memref<1x128xf32, #tpu.memory_space<vmem>>, vector<1x128xf32>
    %4 = vector.broadcast %3 : vector<1x128xf32> to vector<16x128xf32>
    %5 = arith.addf %2, %4 : vector<16x128xf32>
    %cst_5 = arith.constant 0.000000e+00 : f32
    %6 = vector.broadcast %cst_5 : f32 to vector<16x128xf32>
    %7 = arith.maximumf %5, %6 : vector<16x128xf32>
    %8 = arith.truncf %7 : vector<16x128xf32> to vector<16x128xbf16>
    %c0_6 = arith.constant 0 : index
    %c0_7 = arith.constant 0 : index
    %9 = vector.load %arg4[%c0_6, %c0_7] : memref<128x256xbf16, #tpu.memory_space<vmem>>, vector<128x256xbf16>
    %cst_8 = arith.constant dense<0.000000e+00> : vector<16x256xf32>
    %10 = tpu.matmul %8, %9, %cst_8 {dimension_numbers = #tpu.dot_dimension_numbers<[1], [0], [0], [1], [0, 0, 1, 1], [], []>} : vector<16x128xbf16>, vector<128x256xbf16>, vector<16x256xf32> -> vector<16x256xf32>
    %c0_9 = arith.constant 0 : index
    %c0_10 = arith.constant 0 : index
    %11 = vector.load %arg5[%c0_9, %c0_10] : memref<1x256xf32, #tpu.memory_space<vmem>>, vector<1x256xf32>
    %12 = vector.broadcast %11 : vector<1x256xf32> to vector<16x256xf32>
    %13 = arith.addf %10, %12 : vector<16x256xf32>
    %c0_11 = arith.constant 0 : index
    %c0_12 = arith.constant 0 : index
    %14 = vector.load %arg6[%c0_11, %c0_12] : memref<16x256xf32, #tpu.memory_space<vmem>>, vector<16x256xf32>
    tpu.vector_store %arg6[%c0_11, %c0_12], %13 {strides = array<i32>} : memref<16x256xf32, #tpu.memory_space<vmem>>, vector<16x256xf32>,
    return
  }
  func.func @transform_0(%arg0: i32) -> (i32, i32) {
    %c0_i32 = arith.constant 0 : i32
    %c0_i32_0 = arith.constant 0 : i32
    return %arg0, %c0_i32 : i32, i32
  }
  func.func @transform_1(%arg0: i32) -> (i32, i32) {
    %c0_i32 = arith.constant 0 : i32
    %c0_i32_0 = arith.constant 0 : i32
    %c0_i32_1 = arith.constant 0 : i32
    return %c0_i32, %c0_i32_0 : i32, i32
  }
  func.func @transform_2(%arg0: i32) -> (i32, i32) {
    %c0_i32 = arith.constant 0 : i32
    %c0_i32_0 = arith.constant 0 : i32
    %c0_i32_1 = arith.constant 0 : i32
    return %c0_i32, %c0_i32_0 : i32, i32
  }
  func.func @transform_3(%arg0: i32) -> (i32, i32) {
    %c0_i32 = arith.constant 0 : i32
    %c0_i32_0 = arith.constant 0 : i32
    %c0_i32_1 = arith.constant 0 : i32
    return %c0_i32, %c0_i32_0 : i32, i32
  }
  func.func @transform_4(%arg0: i32) -> (i32, i32) {
    %c0_i32 = arith.constant 0 : i32
    %c0_i32_0 = arith.constant 0 : i32
    %c0_i32_1 = arith.constant 0 : i32
    return %c0_i32, %c0_i32_0 : i32, i32
  }
  func.func @transform_5(%arg0: i32) -> (i32, i32) {
    %c0_i32 = arith.constant 0 : i32
    %c0_i32_0 = arith.constant 0 : i32
    return %arg0, %c0_i32 : i32, i32
  }
}

</mosaic_0001>

<llo_original>
// kernel: tpu_custom_call.1
$region0: #{tpu_custom_call.1}
  #allocation0 [shape = 'u32[]', space=smem, size = 0x4, offset = 0x4, fixed_abs, tag = 'smem constant byte address 0x4 - core index']
  #allocation1 [shape = 'u32[144,128]{1,0:T(1,128)}', space=vmem, size = 0x12000, scoped, tag = 'internal scratch']
  %s0 = inlined_call_operand.hbm [shape: bf16[32,256], index: 0, kind: input, shape index: {}]
  %s1 = inlined_call_operand.hbm [shape: bf16[256,128], index: 1, kind: input, shape index: {}]
  %s2 = inlined_call_operand.vmem [shape: f32[1,128], index: 2, kind: input, shape index: {}]
  %s3 = inlined_call_operand.hbm [shape: bf16[128,256], index: 3, kind: input, shape index: {}]
  %s4 = inlined_call_operand.vmem [shape: f32[1,256], index: 4, kind: input, shape index: {}]
  %s5 = inlined_call_operand.hbm [shape: f32[32,256], index: 5, kind: output, shape index: {}]
  %s6 = sld [smem:[#allocation0]]
  $region65: #{tpu_custom_call.1} parent=0
    _
  %s8 = ssub.s32 1, %s6
  %s9 = scalar_select 0, %s8, %s6
  $region1: #{tpu_custom_call.1} parent=0
    #allocation2 [shape = 'u8[16384]{0}', space=vmem, size = 0x4000, scoped, tag = 'input window, operand 0']
    #allocation3 [shape = 's32[2]{0}', space=sflag, size = 0x8, scoped, tag = 'scoped memory for tpu_custom_call.1']
    #allocation4 [shape = 's32[2]{0}', space=sflag, size = 0x8, scoped, tag = 'scoped memory for tpu_custom_call.1']
    #allocation5 [shape = 'u8[65536]{0}', space=vmem, size = 0x10000, scoped, tag = 'input window, operand 1, single buffered']
    #allocation6 [shape = 's32[1]{0}', space=sflag, size = 0x4, scoped, tag = 'scoped memory for tpu_custom_call.1']
    #allocation7 [shape = 'u8[65536]{0}', space=vmem, size = 0x10000, scoped, tag = 'input window, operand 3, single buffered']
    #allocation8 [shape = 'u8[32768]{0}', space=vmem, size = 0x8000, scoped, tag = 'output window, operand 0']
    %10 = vsyncpa [#allocation3], 0
    %s11 = scalar_lea.sflag [#allocation3], 1
    %12 = vsyncpa %s11, 0
    %13 = vsyncpa [#allocation6], 0
    %14 = vsyncpa [#allocation4], 0
    %s15 = scalar_lea.sflag [#allocation4], 1
    %16 = vsyncpa %s15, 0
    loop: start=0, step=1, limit=4
    $region2: #{tpu_custom_call.1} parent=1 // loop_pre_header
      _
    $region3: #{tpu_custom_call.1} parent=1 // loop_header
      %s18 = sphi 0, %s22
      %p19 = scmp.ge.s32.totalorder %s18, 4
      %s28 = sphi 0, %s30
      %s31 = sphi 0, %s28
      %s32 = sphi 0, %s31
      %s48 = sphi 0, %s32
      %s52 = sphi 0, %s52
      %s54 = sphi 0, %s52
      %s55 = sphi 0, %s54
      %s69 = sphi 0, %s55
      %s73 = sphi 0, %s73
      %s75 = sphi 0, %s73
      %s76 = sphi 0, %s75
      %s90 = sphi 0, %s76
      %s94 = sphi 0, %s94
      %s96 = sphi 0, %s94
      %s97 = sphi 0, %s96
      %s111 = sphi 0, %s97
      %s115 = sphi 0, %s115
      %s117 = sphi 0, %s115
      %s118 = sphi 0, %s117
      %s132 = sphi 0, %s118
      %s138 = sphi 0, %s140
      %s141 = sphi 0, %s138
      %s142 = sphi 0, %s141
      %s158 = sphi 0, %s142
    $region4: #{tpu_custom_call.1} parent=1 // loop_header_branch
      %21 = sbr.rel (%p19) target = $region8
    $region5: #{tpu_custom_call.1} parent=1 // loop_body
      %s23 = ssub.s32 %s18, 1
      %s24 = ssub.s32 %s18, 2
      %s25 = sadd.s32 %s18, 1
      %s26 = ssub.s32 %s18, %s25
      %p27 = scmp.eq.s32.totalorder %s26, 0
      %s29 = sadd.s32 %s28, 1
      %s30 = scalar_select %p27, %s28, %s29
      %p33 = pneg %p27
      %p34 = scmp.eq.s32.totalorder %s18, 1
      %p35 = por %p33, %p34
      %p36 = scmp.ne.s32.totalorder %s28, %s31
      %p37 = scmp.eq.s32.totalorder %s18, 0
      %p38 = por %p36, %p37
      %p39 = scmp.ne.s32.totalorder %s28, %s31
      %p40 = scmp.eq.s32.totalorder %s23, 1
      %p41 = por %p39, %p40
      %p42 = scmp.ne.s32.totalorder %s31, %s32
      %p43 = scmp.eq.s32.totalorder %s23, 0
      %p44 = por %p42, %p43
      %p45 = scmp.ne.s32.totalorder %s31, %s32
      %p46 = scmp.eq.s32.totalorder %s24, 1
      %p47 = por %p45, %p46
      %p49 = scmp.ne.s32.totalorder %s32, %s48
      %p50 = scmp.eq.s32.totalorder %s24, 0
      %p51 = por %p49, %p50
      %s53 = sadd.s32 %s52, 1
      %p56 = scmp.eq.s32.totalorder %s18, 1
      %p57 = scmp.ne.s32.totalorder %s52, %s54
      %p58 = scmp.eq.s32.totalorder %s18, 0
      %p59 = por %p57, %p58
      %p60 = scmp.ne.s32.totalorder %s52, %s54
      %p61 = scmp.eq.s32.totalorder %s23, 1
      %p62 = por %p60, %p61
      %p63 = scmp.ne.s32.totalorder %s54, %s55
      %p64 = scmp.eq.s32.totalorder %s23, 0
      %p65 = por %p63, %p64
      %p66 = scmp.ne.s32.totalorder %s54, %s55
      %p67 = scmp.eq.s32.totalorder %s24, 1
      %p68 = por %p66, %p67
      %p70 = scmp.ne.s32.totalorder %s55, %s69
      %p71 = scmp.eq.s32.totalorder %s24, 0
      %p72 = por %p70, %p71
      %s74 = sadd.s32 %s73, 1
      %p77 = scmp.eq.s32.totalorder %s18, 1
      %p78 = scmp.ne.s32.totalorder %s73, %s75
      %p79 = scmp.eq.s32.totalorder %s18, 0
      %p80 = por %p78, %p79
      %p81 = scmp.ne.s32.totalorder %s73, %s75
      %p82 = scmp.eq.s32.totalorder %s23, 1
      %p83 = por %p81, %p82
      %p84 = scmp.ne.s32.totalorder %s75, %s76
      %p85 = scmp.eq.s32.totalorder %s23, 0
      %p86 = por %p84, %p85
      %p87 = scmp.ne.s32.totalorder %s75, %s76
      %p88 = scmp.eq.s32.totalorder %s24, 1
      %p89 = por %p87, %p88
      %p91 = scmp.ne.s32.totalorder %s76, %s90
      %p92 = scmp.eq.s32.totalorder %s24, 0
      %p93 = por %p91, %p92
      %s95 = sadd.s32 %s94, 1
      %p98 = scmp.eq.s32.totalorder %s18, 1
      %p99 = scmp.ne.s32.totalorder %s94, %s96
      %p100 = scmp.eq.s32.totalorder %s18, 0
      %p101 = por %p99, %p100
      %p102 = scmp.ne.s32.totalorder %s94, %s96
      %p103 = scmp.eq.s32.totalorder %s23, 1
      %p104 = por %p102, %p103
      %p105 = scmp.ne.s32.totalorder %s96, %s97
      %p106 = scmp.eq.s32.totalorder %s23, 0
      %p107 = por %p105, %p106
      %p108 = scmp.ne.s32.totalorder %s96, %s97
      %p109 = scmp.eq.s32.totalorder %s24, 1
      %p110 = por %p108, %p109
      %p112 = scmp.ne.s32.totalorder %s97, %s111
      %p113 = scmp.eq.s32.totalorder %s24, 0
      %p114 = por %p112, %p113
      %s116 = sadd.s32 %s115, 1
      %p119 = scmp.eq.s32.totalorder %s18, 1
      %p120 = scmp.ne.s32.totalorder %s115, %s117
      %p121 = scmp.eq.s32.totalorder %s18, 0
      %p122 = por %p120, %p121
      %p123 = scmp.ne.s32.totalorder %s115, %s117
      %p124 = scmp.eq.s32.totalorder %s23, 1
      %p125 = por %p123, %p124
      %p126 = scmp.ne.s32.totalorder %s117, %s118
      %p127 = scmp.eq.s32.totalorder %s23, 0
      %p128 = por %p126, %p127
      %p129 = scmp.ne.s32.totalorder %s117, %s118
      %p130 = scmp.eq.s32.totalorder %s24, 1
      %p131 = por %p129, %p130
      %p133 = scmp.ne.s32.totalorder %s118, %s132
      %p134 = scmp.eq.s32.totalorder %s24, 0
      %p135 = por %p133, %p134
      %s136 = ssub.s32 %s18, %s25
      %p137 = scmp.eq.s32.totalorder %s136, 0
      %s139 = sadd.s32 %s138, 1
      %s140 = scalar_select %p137, %s138, %s139
      %p143 = pneg %p137
      %p144 = scmp.eq.s32.totalorder %s18, 1
      %p145 = por %p143, %p144
      %p146 = scmp.ne.s32.totalorder %s138, %s141
      %p147 = scmp.eq.s32.totalorder %s18, 0
      %p148 = por %p146, %p147
      %p149 = scmp.ne.s32.totalorder %s138, %s141
      %p150 = scmp.eq.s32.totalorder %s23, 1
      %p151 = por %p149, %p150
      %p152 = scmp.ne.s32.totalorder %s141, %s142
      %p153 = scmp.eq.s32.totalorder %s23, 0
      %p154 = por %p152, %p153
      %p155 = scmp.ne.s32.totalorder %s141, %s142
      %p156 = scmp.eq.s32.totalorder %s24, 1
      %p157 = por %p155, %p156
      %p159 = scmp.ne.s32.totalorder %s142, %s158
      %p160 = scmp.eq.s32.totalorder %s24, 0
      %p161 = por %p159, %p160
      %p162 = scmp.le.s32.totalorder 1, %s18
      %p163 = scmp.lt.s32.totalorder %s18, 3
      %p164 = pnand %p162, %p163
      %p165 = pneg %p164
      // Predicated region
      $region9: #{tpu_custom_call.1} parent=5 // pred_check
        _
      $region10: #{tpu_custom_call.1} parent=5 // pred_check_branch
        %167 = sbr.rel (%p164) target = $region12
      $region11: #{tpu_custom_call.1} parent=5 // pred_region
        %s168 = ssub.s32 %s18, 1
        // Predicated region
        $region13: #{tpu_custom_call.1} parent=11 // pred_check
          %p169 = pneg %p65
        $region14: #{tpu_custom_call.1} parent=11 // pred_check_branch
          %171 = sbr.rel (%p169) target = $region16
        $region15: #{tpu_custom_call.1} parent=11 // pred_region
          %s173 = ssub.s32 2048, 2048
          %174 = vsyncadd [#allocation6], %s173
          %s175 = sshll.u32 [#allocation5], 4
          %s176 = int_to_ptr.vmem [resolvable:$true] %s175
          %181 = dma.hbm_to_vmem [thread:$0]  %s1, 2048, %s176, [#allocation6], 64, 64, 4
        $region16: #{tpu_custom_call.1} parent=11 // pred_fallthru
          _
        // Predicated region
        $region17: #{tpu_custom_call.1} parent=11 // pred_check
          %p182 = pneg %p86
        $region18: #{tpu_custom_call.1} parent=11 // pred_check_branch
          %184 = sbr.rel (%p182) target = $region20
        $region19: #{tpu_custom_call.1} parent=11 // pred_region
          _
        $region20: #{tpu_custom_call.1} parent=11 // pred_fallthru
          _
        // Predicated region
        $region21: #{tpu_custom_call.1} parent=11 // pred_check
          %p185 = pneg %p107
        $region22: #{tpu_custom_call.1} parent=11 // pred_check_branch
          %187 = sbr.rel (%p185) target = $region24
        $region23: #{tpu_custom_call.1} parent=11 // pred_region
          %s189 = ssub.s32 2048, 2048
          %190 = vsyncadd [#allocation6], %s189
          %s191 = sshll.u32 [#allocation7], 4
          %s192 = int_to_ptr.vmem [resolvable:$true] %s191
          %197 = dma.hbm_to_vmem [thread:$0]  %s3, 2048, %s192, [#allocation6], 128, 128, 8
        $region24: #{tpu_custom_call.1} parent=11 // pred_fallthru
          _
        // Predicated region
        $region25: #{tpu_custom_call.1} parent=11 // pred_check
          %p198 = pneg %p128
        $region26: #{tpu_custom_call.1} parent=11 // pred_check_branch
          %200 = sbr.rel (%p198) target = $region28
        $region27: #{tpu_custom_call.1} parent=11 // pred_region
          _
        $region28: #{tpu_custom_call.1} parent=11 // pred_fallthru
          _
      $region12: #{tpu_custom_call.1} parent=5 // pred_fallthru
        _
      %p201 = scmp.lt.s32.totalorder %s18, 2
      // Predicated region
      $region29: #{tpu_custom_call.1} parent=5 // pred_check
        %p202 = pneg %p201
      $region30: #{tpu_custom_call.1} parent=5 // pred_check_branch
        %204 = sbr.rel (%p202) target = $region32
      $region31: #{tpu_custom_call.1} parent=5 // pred_region
        // Predicated region
        $region33: #{tpu_custom_call.1} parent=31 // pred_check
          %p205 = pneg %p38
        $region34: #{tpu_custom_call.1} parent=31 // pred_check_branch
          %207 = sbr.rel (%p205) target = $region36
        $region35: #{tpu_custom_call.1} parent=31 // pred_region
          %s208 = sand.u32 %s28, 1
          %s209 = scalar_lea.sflag [#allocation3], %s208
          %s210 = sand.u32 %s28, 1
          %s211 = smul.addr %s210, 16
          %s212 = scalar_lea.vmem [#allocation2], %s211
          %s213 = smul.u32 2, %s18
          %s215 = ssub.s32 256, 256
          %216 = vsyncadd %s209, %s215
          %s217 = smul.addr %s213, 2
          %s218 = smul.addr %s217, 64
          %s219 = scalar_lea.hbm %s0, %s218
          %s220 = sshll.u32 %s212, 4
          %s221 = int_to_ptr.vmem [resolvable:$true] %s220
          %226 = dma.hbm_to_vmem [thread:$0]  %s219, 256, %s221, %s209, 128, 128, 8
        $region36: #{tpu_custom_call.1} parent=31 // pred_fallthru
          _
      $region32: #{tpu_custom_call.1} parent=5 // pred_fallthru
        _
      %p227 = scmp.le.s32.totalorder 1, %s18
      %p228 = scmp.lt.s32.totalorder %s18, 3
      %p229 = pnand %p227, %p228
      %p230 = pneg %p229
      // Predicated region
      $region37: #{tpu_custom_call.1} parent=5 // pred_check
        _
      $region38: #{tpu_custom_call.1} parent=5 // pred_check_branch
        %232 = sbr.rel (%p229) target = $region40
      $region39: #{tpu_custom_call.1} parent=5 // pred_region
        %s233 = ssub.s32 %s18, 1
        %s234 = sand.u32 %s31, 1
        %s235 = scalar_lea.sflag [#allocation3], %s234
        %s236 = sand.u32 %s31, 1
        %s237 = smul.addr %s236, 16
        %s238 = scalar_lea.vmem [#allocation2], %s237
        // Predicated region
        $region41: #{tpu_custom_call.1} parent=39 // pred_check
          %p239 = pneg %p44
        $region42: #{tpu_custom_call.1} parent=39 // pred_check_branch
          %241 = sbr.rel (%p239) target = $region44
        $region43: #{tpu_custom_call.1} parent=39 // pred_region
          %242 = dma.done %s235, 256
        $region44: #{tpu_custom_call.1} parent=39 // pred_fallthru
          _
        // Predicated region
        $region45: #{tpu_custom_call.1} parent=39 // pred_check
          %p243 = pneg %p65
        $region46: #{tpu_custom_call.1} parent=39 // pred_check_branch
          %245 = sbr.rel (%p243) target = $region48
        $region47: #{tpu_custom_call.1} parent=39 // pred_region
          %246 = dma.done [#allocation6], 2048
        $region48: #{tpu_custom_call.1} parent=39 // pred_fallthru
          _
        // Predicated region
        $region49: #{tpu_custom_call.1} parent=39 // pred_check
          %p247 = pneg %p107
        $region50: #{tpu_custom_call.1} parent=39 // pred_check_branch
          %249 = sbr.rel (%p247) target = $region52
        $region51: #{tpu_custom_call.1} parent=39 // pred_region
          %250 = dma.done [#allocation6], 2048
        $region52: #{tpu_custom_call.1} parent=39 // pred_fallthru
          _
        %s251 = sand.u32 %s31, 1
        %s252 = scalar_lea.sflag [#allocation3], %s251
        %s253 = sand.u32 %s31, 1
        %s254 = smul.addr %s253, 16
        %s255 = scalar_lea.vmem [#allocation2], %s254
        %p256 = pneg %p44
        %p257 = pneg %p41
        %p258 = pneg %p65
        %p259 = pneg %p62
        %p260 = pneg %p86
        %p261 = pneg %p83
        %p262 = pneg %p107
        %p263 = pneg %p104
        %p264 = pneg %p128
        %p265 = pneg %p125
        %p266 = pneg %p154
        %p267 = pneg %p151
        %s268 = sand.u32 %s141, 1
        %s269 = scalar_lea.sflag [#allocation4], %s268
        %s270 = sand.u32 %s141, 1
        %s271 = smul.addr %s270, 32
        %s272 = scalar_lea.vmem [#allocation8], %s271
        %s273 = smul.u32 2, %s23
        %s274 = smul.u32 2, %s23
        %v276 = vld [vmem:[%s238] sm:$0xff]
        %v277 = vld [vmem:[%s238 + $0x8] sm:$0xff]
        %v278 = vld [vmem:[#allocation5] sm:$0xf]
        %v279 = vld [vmem:[#allocation5 + $0x4] sm:$0xf]
        %v280 = vld [vmem:[#allocation5 + $0x8] sm:$0xf]
        %v281 = vld [vmem:[#allocation5 + $0xc] sm:$0xf]
        %v282 = vld [vmem:[#allocation5 + $0x10] sm:$0xf]
        %v283 = vld [vmem:[#allocation5 + $0x14] sm:$0xf]
        %v284 = vld [vmem:[#allocation5 + $0x18] sm:$0xf]
        %v285 = vld [vmem:[#allocation5 + $0x1c] sm:$0xf]
        %v286 = vld [vmem:[#allocation5 + $0x20] sm:$0xf]
        %v287 = vld [vmem:[#allocation5 + $0x24] sm:$0xf]
        %v288 = vld [vmem:[#allocation5 + $0x28] sm:$0xf]
        %v289 = vld [vmem:[#allocation5 + $0x2c] sm:$0xf]
        %v290 = vld [vmem:[#allocation5 + $0x30] sm:$0xf]
        %v291 = vld [vmem:[#allocation5 + $0x34] sm:$0xf]
        %v292 = vld [vmem:[#allocation5 + $0x38] sm:$0xf]
        %v293 = vld [vmem:[#allocation5 + $0x3c] sm:$0xf]
        %v294 = vld [vmem:[#allocation5 + $0x40] sm:$0xf]
        %v295 = vld [vmem:[#allocation5 + $0x44] sm:$0xf]
        %v296 = vld [vmem:[#allocation5 + $0x48] sm:$0xf]
        %v297 = vld [vmem:[#allocation5 + $0x4c] sm:$0xf]
        %v298 = vld [vmem:[#allocation5 + $0x50] sm:$0xf]
        %v299 = vld [vmem:[#allocation5 + $0x54] sm:$0xf]
        %v300 = vld [vmem:[#allocation5 + $0x58] sm:$0xf]
        %v301 = vld [vmem:[#allocation5 + $0x5c] sm:$0xf]
        %v302 = vld [vmem:[#allocation5 + $0x60] sm:$0xf]
        %v303 = vld [vmem:[#allocation5 + $0x64] sm:$0xf]
        %v304 = vld [vmem:[#allocation5 + $0x68] sm:$0xf]
        %v305 = vld [vmem:[#allocation5 + $0x6c] sm:$0xf]
        %v306 = vld [vmem:[#allocation5 + $0x70] sm:$0xf]
        %v307 = vld [vmem:[#allocation5 + $0x74] sm:$0xf]
        %v308 = vld [vmem:[#allocation5 + $0x78] sm:$0xf]
        %v309 = vld [vmem:[#allocation5 + $0x7c] sm:$0xf]
        %v310 = vld [vmem:[%s2] sm:$0x1]
        %v312 = vlaneseq
        %v313 = vshrl.u32 %v312, 7
        %v314 = vsub.s32 0, %v313
        %v315 = vrot.slane %v310, %v314
        %v319 = vunpack.c.l.b16 %v276
        %v320 = vunpack.c.h.b16 %v276
        %v321 = vunpack.c.l.b16 %v277
        %v322 = vunpack.c.h.b16 %v277
        %v323 = vpack.c.b16 %v321, %v319
        %v324 = vpack.c.b16 %v322, %v320
        %v359 = vunpack.c.l.b16 %v278
        %v360 = vunpack.c.l.b16 %v279
        %v361 = vunpack.c.l.b16 %v280
        %v362 = vunpack.c.l.b16 %v281
        %v363 = vunpack.c.l.b16 %v282
        %v364 = vunpack.c.l.b16 %v283
        %v365 = vunpack.c.l.b16 %v284
        %v366 = vunpack.c.l.b16 %v285
        %v367 = vunpack.c.l.b16 %v286
        %v368 = vunpack.c.l.b16 %v287
        %v369 = vunpack.c.l.b16 %v288
        %v370 = vunpack.c.l.b16 %v289
        %v371 = vunpack.c.l.b16 %v290
        %v372 = vunpack.c.l.b16 %v291
        %v373 = vunpack.c.l.b16 %v292
        %v374 = vunpack.c.l.b16 %v293
        %v375 = vunpack.c.l.b16 %v294
        %v376 = vunpack.c.l.b16 %v295
        %v377 = vunpack.c.l.b16 %v296
        %v378 = vunpack.c.l.b16 %v297
        %v379 = vunpack.c.l.b16 %v298
        %v380 = vunpack.c.l.b16 %v299
        %v381 = vunpack.c.l.b16 %v300
        %v382 = vunpack.c.l.b16 %v301
        %v383 = vunpack.c.l.b16 %v302
        %v384 = vunpack.c.l.b16 %v303
        %v385 = vunpack.c.l.b16 %v304
        %v386 = vunpack.c.l.b16 %v305
        %v387 = vunpack.c.l.b16 %v306
        %v388 = vunpack.c.l.b16 %v307
        %v389 = vunpack.c.l.b16 %v308
        %v390 = vunpack.c.l.b16 %v309
        %v391 = vpack.c.b16 %v360, %v359
        %v392 = vpack.c.b16 %v362, %v361
        %v393 = vpack.c.b16 %v364, %v363
        %v394 = vpack.c.b16 %v366, %v365
        %v395 = vpack.c.b16 %v368, %v367
        %v396 = vpack.c.b16 %v370, %v369
        %v397 = vpack.c.b16 %v372, %v371
        %v398 = vpack.c.b16 %v374, %v373
        %v399 = vpack.c.b16 %v376, %v375
        %v400 = vpack.c.b16 %v378, %v377
        %v401 = vpack.c.b16 %v380, %v379
        %v402 = vpack.c.b16 %v382, %v381
        %v403 = vpack.c.b16 %v384, %v383
        %v404 = vpack.c.b16 %v386, %v385
        %v405 = vpack.c.b16 %v388, %v387
        %v406 = vpack.c.b16 %v390, %v389
        %423 = vmatprep.subr.bf16.mxu0 0
        %424 = vmatpush1.bf16.msra.mxu0 %v398
        %425 = vmatprep.subr.bf16.mxu0 0
        %426 = vmatpush1.bf16.msra.mxu0 %v397
        %427 = vmatprep.subr.bf16.mxu0 0
        %428 = vmatpush1.bf16.msra.mxu0 %v396
        %429 = vmatprep.subr.bf16.mxu0 0
        %430 = vmatpush1.bf16.msra.mxu0 %v395
        %431 = vmatprep.subr.bf16.mxu0 0
        %432 = vmatpush1.bf16.msra.mxu0 %v394
        %433 = vmatprep.subr.bf16.mxu0 0
        %434 = vmatpush1.bf16.msra.mxu0 %v393
        %435 = vmatprep.subr.bf16.mxu0 0
        %436 = vmatpush1.bf16.msra.mxu0 %v392
        %437 = vmatprep.subr.bf16.mxu0 0
        %438 = vmatpush1.bf16.msra.mxu0 %v391
        %439 = vmatprep.subr.bf16.mxu0 0
        %440 = vmatpush2.bf16.msra.mxu0 %v406
        %441 = vmatprep.subr.bf16.mxu0 0
        %442 = vmatpush2.bf16.msra.mxu0 %v405
        %443 = vmatprep.subr.bf16.mxu0 0
        %444 = vmatpush2.bf16.msra.mxu0 %v404
        %445 = vmatprep.subr.bf16.mxu0 0
        %446 = vmatpush2.bf16.msra.mxu0 %v403
        %447 = vmatprep.subr.bf16.mxu0 0
        %448 = vmatpush2.bf16.msra.mxu0 %v402
        %449 = vmatprep.subr.bf16.mxu0 0
        %450 = vmatpush2.bf16.msra.mxu0 %v401
        %451 = vmatprep.subr.bf16.mxu0 0
        %452 = vmatpush2.bf16.msra.mxu0 %v400
        %453 = vmatprep.subr.bf16.mxu0 0
        %454 = vmatpush2.bf16.msra.mxu0 %v399
        %455 = vmatprep.mubr.bf16.mxu0 %v324
        %456 = vmatmul.mubr.bf16.gmra.mxu0 %v323
        %v457 = vpop.f32.mrf.mxu0
        %v458 = vadd.f32 %v315, %v457
        %v459 = vpop.f32.mrf.mxu0
        %v460 = vpop.f32.mrf.mxu0
        %v461 = vadd.f32 %v315, %v460
        %v462 = vpop.f32.mrf.mxu0
        %463 = vdwg.mxu0
        %v464 = vmax.f32 %v458, 0.0
        %v465 = vmax.f32 %v461, 0.0
        %v466 = vpack.c.bf16 %v465, %v464
        %v467 = vld [vmem:[#allocation7] sm:$0xff]
        %v468 = vld [vmem:[#allocation7 + $0x8] sm:$0xff]
        %v469 = vld [vmem:[#allocation7 + $0x10] sm:$0xff]
        %v470 = vld [vmem:[#allocation7 + $0x18] sm:$0xff]
        %v471 = vld [vmem:[#allocation7 + $0x20] sm:$0xff]
        %v472 = vld [vmem:[#allocation7 + $0x28] sm:$0xff]
        %v473 = vld [vmem:[#allocation7 + $0x30] sm:$0xff]
        %v474 = vld [vmem:[#allocation7 + $0x38] sm:$0xff]
        %v475 = vld [vmem:[#allocation7 + $0x40] sm:$0xff]
        %v476 = vld [vmem:[#allocation7 + $0x48] sm:$0xff]
        %v477 = vld [vmem:[#allocation7 + $0x50] sm:$0xff]
        %v478 = vld [vmem:[#allocation7 + $0x58] sm:$0xff]
        %v479 = vld [vmem:[#allocation7 + $0x60] sm:$0xff]
        %v480 = vld [vmem:[#allocation7 + $0x68] sm:$0xff]
        %v481 = vld [vmem:[#allocation7 + $0x70] sm:$0xff]
        %v482 = vld [vmem:[#allocation7 + $0x78] sm:$0xff]
        %v483 = vld [vmem:[%s4] sm:$0x3]
        %v485 = vlaneseq
        %v486 = vshrl.u32 %v485, 7
        %v487 = vsub.s32 0, %v486
        %v488 = vrot.slane %v483, %v487
        %v489 = vlaneseq
        %v490 = vshrl.u32 %v489, 7
        %v491 = vsub.s32 1, %v490
        %v492 = vrot.slane %v483, %v491
        %v511 = vunpack.c.l.b16 %v467
        %v512 = vunpack.c.h.b16 %v467
        %v513 = vunpack.c.l.b16 %v468
        %v514 = vunpack.c.h.b16 %v468
        %v515 = vunpack.c.l.b16 %v469
        %v516 = vunpack.c.h.b16 %v469
        %v517 = vunpack.c.l.b16 %v470
        %v518 = vunpack.c.h.b16 %v470
        %v519 = vunpack.c.l.b16 %v471
        %v520 = vunpack.c.h.b16 %v471
        %v521 = vunpack.c.l.b16 %v472
        %v522 = vunpack.c.h.b16 %v472
        %v523 = vunpack.c.l.b16 %v473
        %v524 = vunpack.c.h.b16 %v473
        %v525 = vunpack.c.l.b16 %v474
        %v526 = vunpack.c.h.b16 %v474
        %v527 = vunpack.c.l.b16 %v475
        %v528 = vunpack.c.h.b16 %v475
        %v529 = vunpack.c.l.b16 %v476
        %v530 = vunpack.c.h.b16 %v476
        %v531 = vunpack.c.l.b16 %v477
        %v532 = vunpack.c.h.b16 %v477
        %v533 = vunpack.c.l.b16 %v478
        %v534 = vunpack.c.h.b16 %v478
        %v535 = vunpack.c.l.b16 %v479
        %v536 = vunpack.c.h.b16 %v479
        %v537 = vunpack.c.l.b16 %v480
        %v538 = vunpack.c.h.b16 %v480
        %v539 = vunpack.c.l.b16 %v481
        %v540 = vunpack.c.h.b16 %v481
        %v541 = vunpack.c.l.b16 %v482
        %v542 = vunpack.c.h.b16 %v482
        %v543 = vpack.c.b16 %v513, %v511
        %v544 = vpack.c.b16 %v514, %v512
        %v545 = vpack.c.b16 %v517, %v515
        %v546 = vpack.c.b16 %v518, %v516
        %v547 = vpack.c.b16 %v521, %v519
        %v548 = vpack.c.b16 %v522, %v520
        %v549 = vpack.c.b16 %v525, %v523
        %v550 = vpack.c.b16 %v526, %v524
        %v551 = vpack.c.b16 %v529, %v527
        %v552 = vpack.c.b16 %v530, %v528
        %v553 = vpack.c.b16 %v533, %v531
        %v554 = vpack.c.b16 %v534, %v532
        %v555 = vpack.c.b16 %v537, %v535
        %v556 = vpack.c.b16 %v538, %v536
        %v557 = vpack.c.b16 %v541, %v539
        %v558 = vpack.c.b16 %v542, %v540
        %575 = vmatprep.subr.bf16.mxu0 %v558
        %576 = vmatpush1.bf16.msra.mxu0 %v557
        %577 = vmatprep.subr.bf16.mxu0 %v556
        %578 = vmatpush1.bf16.msra.mxu0 %v555
        %579 = vmatprep.subr.bf16.mxu0 %v554
        %580 = vmatpush1.bf16.msra.mxu0 %v553
        %581 = vmatprep.subr.bf16.mxu0 %v552
        %582 = vmatpush1.bf16.msra.mxu0 %v551
        %583 = vmatprep.subr.bf16.mxu0 %v550
        %584 = vmatpush1.bf16.msra.mxu0 %v549
        %585 = vmatprep.subr.bf16.mxu0 %v548
        %586 = vmatpush1.bf16.msra.mxu0 %v547
        %587 = vmatprep.subr.bf16.mxu0 %v546
        %588 = vmatpush1.bf16.msra.mxu0 %v545
        %589 = vmatprep.subr.bf16.mxu0 %v544
        %590 = vmatpush1.bf16.msra.mxu0 %v543
        %591 = vmatprep.subr.bf16.mxu0 0
        %592 = vmatpush2.bf16.msra.mxu0 0
        %593 = vmatprep.subr.bf16.mxu0 0
        %594 = vmatpush2.bf16.msra.mxu0 0
        %595 = vmatprep.subr.bf16.mxu0 0
        %596 = vmatpush2.bf16.msra.mxu0 0
        %597 = vmatprep.subr.bf16.mxu0 0
        %598 = vmatpush2.bf16.msra.mxu0 0
        %599 = vmatprep.subr.bf16.mxu0 0
        %600 = vmatpush2.bf16.msra.mxu0 0
        %601 = vmatprep.subr.bf16.mxu0 0
        %602 = vmatpush2.bf16.msra.mxu0 0
        %603 = vmatprep.subr.bf16.mxu0 0
        %604 = vmatpush2.bf16.msra.mxu0 0
        %605 = vmatprep.subr.bf16.mxu0 0
        %606 = vmatpush2.bf16.msra.mxu0 0
        %607 = vmatprep.mubr.bf16.mxu0 0
        %608 = vmatmul.mubr.bf16.gmra.mxu0 %v466
        %v609 = vpop.f32.mrf.mxu0
        %v610 = vadd.f32 %v488, %v609
        %v611 = vpop.f32.mrf.mxu0
        %v612 = vadd.f32 %v492, %v611
        %v613 = vpop.f32.mrf.mxu0
        %v614 = vadd.f32 %v488, %v613
        %v615 = vpop.f32.mrf.mxu0
        %v616 = vadd.f32 %v492, %v615
        %617 = vdwg.mxu0
        %618 = vst [vmem:[%s272] sm:$0xff] %v610
        %619 = vst [vmem:[%s272 + $0x8] sm:$0xff] %v612
        %620 = vst [vmem:[%s272 + $0x10] sm:$0xff] %v614
        %621 = vst [vmem:[%s272 + $0x18] sm:$0xff] %v616
        %s622 = sand.u32 %s141, 1
        %s623 = scalar_lea.sflag [#allocation4], %s622
        %s624 = sand.u32 %s141, 1
        %s625 = smul.addr %s624, 32
        %s626 = scalar_lea.vmem [#allocation8], %s625
        // Predicated region
        $region53: #{tpu_custom_call.1} parent=39 // pred_check
          %p627 = pneg %p151
        $region54: #{tpu_custom_call.1} parent=39 // pred_check_branch
          %629 = sbr.rel (%p627) target = $region56
        $region55: #{tpu_custom_call.1} parent=39 // pred_region
          %s630 = smul.u32 2, %s23
          %s632 = ssub.s32 512, 512
          %633 = vsyncadd %s623, %s632
          %s634 = smul.addr %s630, 2
          %s635 = smul.addr %s634, 128
          %s636 = scalar_lea.hbm %s5, %s635
          %s637 = sshll.u32 %s626, 4
          %s638 = int_to_ptr.vmem [resolvable:$true] %s637
          %643 = dma.vmem_to_hbm [thread:$0]  %s638, 512, %s636, %s623, 256, 256, 16
        $region56: #{tpu_custom_call.1} parent=39 // pred_fallthru
          _
      $region40: #{tpu_custom_call.1} parent=5 // pred_fallthru
        _
      %p644 = scmp.le.s32.totalorder 2, %s18
      // Predicated region
      $region57: #{tpu_custom_call.1} parent=5 // pred_check
        %p645 = pneg %p644
      $region58: #{tpu_custom_call.1} parent=5 // pred_check_branch
        %647 = sbr.rel (%p645) target = $region60
      $region59: #{tpu_custom_call.1} parent=5 // pred_region
        %s648 = ssub.s32 %s18, 2
        // Predicated region
        $region61: #{tpu_custom_call.1} parent=59 // pred_check
          %p649 = pneg %p157
        $region62: #{tpu_custom_call.1} parent=59 // pred_check_branch
          %651 = sbr.rel (%p649) target = $region64
        $region63: #{tpu_custom_call.1} parent=59 // pred_region
          %s652 = sand.u32 %s142, 1
          %s653 = scalar_lea.sflag [#allocation4], %s652
          %s654 = sand.u32 %s142, 1
          %s655 = smul.addr %s654, 32
          %s656 = scalar_lea.vmem [#allocation8], %s655
          %657 = dma.done %s653, 512
        $region64: #{tpu_custom_call.1} parent=59 // pred_fallthru
          _
      $region60: #{tpu_custom_call.1} parent=5 // pred_fallthru
        _
    $region6: #{tpu_custom_call.1} parent=1 // loop_footer
      %s22 = sadd.s32 1, %s18
    $region7: #{tpu_custom_call.1} parent=1 // loop_footer_branch
      %17 = sbr.rel target = $region3
    $region8: #{tpu_custom_call.1} parent=1 // loop_exit
      _
    %658 = vsyncpa [#allocation3], 1
    %s659 = scalar_lea.sflag [#allocation3], 1
    %660 = vsyncpa %s659, 1
    %661 = vsyncpa [#allocation6], 1
    %662 = vsyncpa [#allocation4], 1
    %s663 = scalar_lea.sflag [#allocation4], 1
    %664 = vsyncpa %s663, 1

// kernel: tpu_custom_call.1
$region0: #{tpu_custom_call.1}
  #allocation0 [shape = 'u32[]', space=smem, size = 0x4, offset = 0x4, fixed_abs, tag = 'smem constant byte address 0x4 - core index']
  #allocation1 [shape = 'u32[144,128]{1,0:T(1,128)}', space=vmem, size = 0x12000, scoped, tag = 'internal scratch']
  %s0 = inlined_call_operand.hbm [shape: bf16[32,256], index: 0, kind: input, shape index: {}]
  %s1 = inlined_call_operand.hbm [shape: bf16[256,128], index: 1, kind: input, shape index: {}]
  %s2 = inlined_call_operand.vmem [shape: f32[1,128], index: 2, kind: input, shape index: {}]
  %s3 = inlined_call_operand.hbm [shape: bf16[128,256], index: 3, kind: input, shape index: {}]
  %s4 = inlined_call_operand.vmem [shape: f32[1,256], index: 4, kind: input, shape index: {}]
  %s5 = inlined_call_operand.hbm [shape: f32[32,256], index: 5, kind: output, shape index: {}]
  %s6 = sld [smem:[#allocation0]]
  $region65: #{tpu_custom_call.1} parent=0
    _
  %s8 = ssub.s32 1, %s6
  %s9 = scalar_select 0, %s8, %s6
  $region1: #{tpu_custom_call.1} parent=0
    #allocation2 [shape = 'u8[16384]{0}', space=vmem, size = 0x4000, scoped, tag = 'input window, operand 0']
    #allocation3 [shape = 's32[2]{0}', space=sflag, size = 0x8, scoped, tag = 'scoped memory for tpu_custom_call.1']
    #allocation4 [shape = 's32[2]{0}', space=sflag, size = 0x8, scoped, tag = 'scoped memory for tpu_custom_call.1']
    #allocation5 [shape = 'u8[65536]{0}', space=vmem, size = 0x10000, scoped, tag = 'input window, operand 1, single buffered']
    #allocation6 [shape = 's32[1]{0}', space=sflag, size = 0x4, scoped, tag = 'scoped memory for tpu_custom_call.1']
    #allocation7 [shape = 'u8[65536]{0}', space=vmem, size = 0x10000, scoped, tag = 'input window, operand 3, single buffered']
    #allocation8 [shape = 'u8[32768]{0}', space=vmem, size = 0x8000, scoped, tag = 'output window, operand 0']
    %10 = vsyncpa [#allocation3], 0
    %s11 = scalar_lea.sflag [#allocation3], 1
    %12 = vsyncpa %s11, 0
    %13 = vsyncpa [#allocation6], 0
    %14 = vsyncpa [#allocation4], 0
    %s15 = scalar_lea.sflag [#allocation4], 1
    %16 = vsyncpa %s15, 0
    loop: start=0, step=1, limit=4
    $region2: #{tpu_custom_call.1} parent=1 // loop_pre_header
      _
    $region3: #{tpu_custom_call.1} parent=1 // loop_header
      %s18 = sphi 0, %s22
      %p19 = scmp.ge.s32.totalorder %s18, 4
      %s28 = sphi 0, %s30
      %s31 = sphi 0, %s28
      %s32 = sphi 0, %s31
      %s48 = sphi 0, %s32
      %s52 = sphi 0, %s52
      %s54 = sphi 0, %s52
      %s55 = sphi 0, %s54
      %s69 = sphi 0, %s55
      %s73 = sphi 0, %s73
      %s75 = sphi 0, %s73
      %s76 = sphi 0, %s75
      %s90 = sphi 0, %s76
      %s94 = sphi 0, %s94
      %s96 = sphi 0, %s94
      %s97 = sphi 0, %s96
      %s111 = sphi 0, %s97
      %s115 = sphi 0, %s115
      %s117 = sphi 0, %s115
      %s118 = sphi 0, %s117
      %s132 = sphi 0, %s118
      %s138 = sphi 0, %s140
      %s141 = sphi 0, %s138
      %s142 = sphi 0, %s141
      %s158 = sphi 0, %s142
    $region4: #{tpu_custom_call.1} parent=1 // loop_header_branch
      %21 = sbr.rel (%p19) target = $region8
    $region5: #{tpu_custom_call.1} parent=1 // loop_body
      %s23 = ssub.s32 %s18, 1
      %s24 = ssub.s32 %s18, 2
      %s25 = sadd.s32 %s18, 1
      %s26 = ssub.s32 %s18, %s25
      %p27 = scmp.eq.s32.totalorder %s26, 0
      %s29 = sadd.s32 %s28, 1
      %s30 = scalar_select %p27, %s28, %s29
      %p33 = pneg %p27
      %p34 = scmp.eq.s32.totalorder %s18, 1
      %p35 = por %p33, %p34
      %p36 = scmp.ne.s32.totalorder %s28, %s31
      %p37 = scmp.eq.s32.totalorder %s18, 0
      %p38 = por %p36, %p37
      %p39 = scmp.ne.s32.totalorder %s28, %s31
      %p40 = scmp.eq.s32.totalorder %s23, 1
      %p41 = por %p39, %p40
      %p42 = scmp.ne.s32.totalorder %s31, %s32
      %p43 = scmp.eq.s32.totalorder %s23, 0
      %p44 = por %p42, %p43
      %p45 = scmp.ne.s32.totalorder %s31, %s32
      %p46 = scmp.eq.s32.totalorder %s24, 1
      %p47 = por %p45, %p46
      %p49 = scmp.ne.s32.totalorder %s32, %s48
      %p50 = scmp.eq.s32.totalorder %s24, 0
      %p51 = por %p49, %p50
      %s53 = sadd.s32 %s52, 1
      %p56 = scmp.eq.s32.totalorder %s18, 1
      %p57 = scmp.ne.s32.totalorder %s52, %s54
      %p58 = scmp.eq.s32.totalorder %s18, 0
      %p59 = por %p57, %p58
      %p60 = scmp.ne.s32.totalorder %s52, %s54
      %p61 = scmp.eq.s32.totalorder %s23, 1
      %p62 = por %p60, %p61
      %p63 = scmp.ne.s32.totalorder %s54, %s55
      %p64 = scmp.eq.s32.totalorder %s23, 0
      %p65 = por %p63, %p64
      %p66 = scmp.ne.s32.totalorder %s54, %s55
      %p67 = scmp.eq.s32.totalorder %s24, 1
      %p68 = por %p66, %p67
      %p70 = scmp.ne.s32.totalorder %s55, %s69
      %p71 = scmp.eq.s32.totalorder %s24, 0
      %p72 = por %p70, %p71
      %s74 = sadd.s32 %s73, 1
      %p77 = scmp.eq.s32.totalorder %s18, 1
      %p78 = scmp.ne.s32.totalorder %s73, %s75
      %p79 = scmp.eq.s32.totalorder %s18, 0
      %p80 = por %p78, %p79
      %p81 = scmp.ne.s32.totalorder %s73, %s75
      %p82 = scmp.eq.s32.totalorder %s23, 1
      %p83 = por %p81, %p82
      %p84 = scmp.ne.s32.totalorder %s75, %s76
      %p85 = scmp.eq.s32.totalorder %s23, 0
      %p86 = por %p84, %p85
      %p87 = scmp.ne.s32.totalorder %s75, %s76
      %p88 = scmp.eq.s32.totalorder %s24, 1
      %p89 = por %p87, %p88
      %p91 = scmp.ne.s32.totalorder %s76, %s90
      %p92 = scmp.eq.s32.totalorder %s24, 0
      %p93 = por %p91, %p92
      %s95 = sadd.s32 %s94, 1
      %p98 = scmp.eq.s32.totalorder %s18, 1
      %p99 = scmp.ne.s32.totalorder %s94, %s96
      %p100 = scmp.eq.s32.totalorder %s18, 0
      %p101 = por %p99, %p100
      %p102 = scmp.ne.s32.totalorder %s94, %s96
      %p103 = scmp.eq.s32.totalorder %s23, 1
      %p104 = por %p102, %p103
      %p105 = scmp.ne.s32.totalorder %s96, %s97
      %p106 = scmp.eq.s32.totalorder %s23, 0
      %p107 = por %p105, %p106
      %p108 = scmp.ne.s32.totalorder %s96, %s97
      %p109 = scmp.eq.s32.totalorder %s24, 1
      %p110 = por %p108, %p109
      %p112 = scmp.ne.s32.totalorder %s97, %s111
      %p113 = scmp.eq.s32.totalorder %s24, 0
      %p114 = por %p112, %p113
      %s116 = sadd.s32 %s115, 1
      %p119 = scmp.eq.s32.totalorder %s18, 1
      %p120 = scmp.ne.s32.totalorder %s115, %s117
      %p121 = scmp.eq.s32.totalorder %s18, 0
      %p122 = por %p120, %p121
      %p123 = scmp.ne.s32.totalorder %s115, %s117
      %p124 = scmp.eq.s32.totalorder %s23, 1
      %p125 = por %p123, %p124
      %p126 = scmp.ne.s32.totalorder %s117, %s118
      %p127 = scmp.eq.s32.totalorder %s23, 0
      %p128 = por %p126, %p127
      %p129 = scmp.ne.s32.totalorder %s117, %s118
      %p130 = scmp.eq.s32.totalorder %s24, 1
      %p131 = por %p129, %p130
      %p133 = scmp.ne.s32.totalorder %s118, %s132
      %p134 = scmp.eq.s32.totalorder %s24, 0
      %p135 = por %p133, %p134
      %s136 = ssub.s32 %s18, %s25
      %p137 = scmp.eq.s32.totalorder %s136, 0
      %s139 = sadd.s32 %s138, 1
      %s140 = scalar_select %p137, %s138, %s139
      %p143 = pneg %p137
      %p144 = scmp.eq.s32.totalorder %s18, 1
      %p145 = por %p143, %p144
      %p146 = scmp.ne.s32.totalorder %s138, %s141
      %p147 = scmp.eq.s32.totalorder %s18, 0
      %p148 = por %p146, %p147
      %p149 = scmp.ne.s32.totalorder %s138, %s141
      %p150 = scmp.eq.s32.totalorder %s23, 1
      %p151 = por %p149, %p150
      %p152 = scmp.ne.s32.totalorder %s141, %s142
      %p153 = scmp.eq.s32.totalorder %s23, 0
      %p154 = por %p152, %p153
      %p155 = scmp.ne.s32.totalorder %s141, %s142
      %p156 = scmp.eq.s32.totalorder %s24, 1
      %p157 = por %p155, %p156
      %p159 = scmp.ne.s32.totalorder %s142, %s158
      %p160 = scmp.eq.s32.totalorder %s24, 0
      %p161 = por %p159, %p160
      %p162 = scmp.le.s32.totalorder 1, %s18
      %p163 = scmp.lt.s32.totalorder %s18, 3
      %p164 = pnand %p162, %p163
      %p165 = pneg %p164
      // Predicated region
      $region9: #{tpu_custom_call.1} parent=5 // pred_check
        _
      $region10: #{tpu_custom_call.1} parent=5 // pred_check_branch
        %167 = sbr.rel (%p164) target = $region12
      $region11: #{tpu_custom_call.1} parent=5 // pred_region
        %s168 = ssub.s32 %s18, 1
        // Predicated region
        $region13: #{tpu_custom_call.1} parent=11 // pred_check
          %p169 = pneg %p65
        $region14: #{tpu_custom_call.1} parent=11 // pred_check_branch
          %171 = sbr.rel (%p169) target = $region16
        $region15: #{tpu_custom_call.1} parent=11 // pred_region
          %s173 = ssub.s32 2048, 2048
          %174 = vsyncadd [#allocation6], %s173
          %s175 = sshll.u32 [#allocation5], 4
          %s176 = int_to_ptr.vmem [resolvable:$true] %s175
          %181 = dma.hbm_to_vmem [thread:$0]  %s1, 2048, %s176, [#allocation6], 64, 64, 4
        $region16: #{tpu_custom_call.1} parent=11 // pred_fallthru
          _
        // Predicated region
        $region17: #{tpu_custom_call.1} parent=11 // pred_check
          %p182 = pneg %p86
        $region18: #{tpu_custom_call.1} parent=11 // pred_check_branch
          %184 = sbr.rel (%p182) target = $region20
        $region19: #{tpu_custom_call.1} parent=11 // pred_region
          _
        $region20: #{tpu_custom_call.1} parent=11 // pred_fallthru
          _
        // Predicated region
        $region21: #{tpu_custom_call.1} parent=11 // pred_check
          %p185 = pneg %p107
        $region22: #{tpu_custom_call.1} parent=11 // pred_check_branch
          %187 = sbr.rel (%p185) target = $region24
        $region23: #{tpu_custom_call.1} parent=11 // pred_region
          %s189 = ssub.s32 2048, 2048
          %190 = vsyncadd [#allocation6], %s189
          %s191 = sshll.u32 [#allocation7], 4
          %s192 = int_to_ptr.vmem [resolvable:$true] %s191
          %197 = dma.hbm_to_vmem [thread:$0]  %s3, 2048, %s192, [#allocation6], 128, 128, 8
        $region24: #{tpu_custom_call.1} parent=11 // pred_fallthru
          _
        // Predicated region
        $region25: #{tpu_custom_call.1} parent=11 // pred_check
          %p198 = pneg %p128
        $region26: #{tpu_custom_call.1} parent=11 // pred_check_branch
          %200 = sbr.rel (%p198) target = $region28
        $region27: #{tpu_custom_call.1} parent=11 // pred_region
          _
        $region28: #{tpu_custom_call.1} parent=11 // pred_fallthru
          _
      $region12: #{tpu_custom_call.1} parent=5 // pred_fallthru
        _
      %p201 = scmp.lt.s32.totalorder %s18, 2
      // Predicated region
      $region29: #{tpu_custom_call.1} parent=5 // pred_check
        %p202 = pneg %p201
      $region30: #{tpu_custom_call.1} parent=5 // pred_check_branch
        %204 = sbr.rel (%p202) target = $region32
      $region31: #{tpu_custom_call.1} parent=5 // pred_region
        // Predicated region
        $region33: #{tpu_custom_call.1} parent=31 // pred_check
          %p205 = pneg %p38
        $region34: #{tpu_custom_call.1} parent=31 // pred_check_branch
          %207 = sbr.rel (%p205) target = $region36
        $region35: #{tpu_custom_call.1} parent=31 // pred_region
          %s208 = sand.u32 %s28, 1
          %s209 = scalar_lea.sflag [#allocation3], %s208
          %s210 = sand.u32 %s28, 1
          %s211 = smul.addr %s210, 16
          %s212 = scalar_lea.vmem [#allocation2], %s211
          %s213 = smul.u32 2, %s18
          %s215 = ssub.s32 256, 256
          %216 = vsyncadd %s209, %s215
          %s217 = smul.addr %s213, 2
          %s218 = smul.addr %s217, 64
          %s219 = scalar_lea.hbm %s0, %s218
          %s220 = sshll.u32 %s212, 4
          %s221 = int_to_ptr.vmem [resolvable:$true] %s220
          %226 = dma.hbm_to_vmem [thread:$0]  %s219, 256, %s221, %s209, 128, 128, 8
        $region36: #{tpu_custom_call.1} parent=31 // pred_fallthru
          _
      $region32: #{tpu_custom_call.1} parent=5 // pred_fallthru
        _
      %p227 = scmp.le.s32.totalorder 1, %s18
      %p228 = scmp.lt.s32.totalorder %s18, 3
      %p229 = pnand %p227, %p228
      %p230 = pneg %p229
      // Predicated region
      $region37: #{tpu_custom_call.1} parent=5 // pred_check
        _
      $region38: #{tpu_custom_call.1} parent=5 // pred_check_branch
        %232 = sbr.rel (%p229) target = $region40
      $region39: #{tpu_custom_call.1} parent=5 // pred_region
        %s233 = ssub.s32 %s18, 1
        %s234 = sand.u32 %s31, 1
        %s235 = scalar_lea.sflag [#allocation3], %s234
        %s236 = sand.u32 %s31, 1
        %s237 = smul.addr %s236, 16
        %s238 = scalar_lea.vmem [#allocation2], %s237
        // Predicated region
        $region41: #{tpu_custom_call.1} parent=39 // pred_check
          %p239 = pneg %p44
        $region42: #{tpu_custom_call.1} parent=39 // pred_check_branch
          %241 = sbr.rel (%p239) target = $region44
        $region43: #{tpu_custom_call.1} parent=39 // pred_region
          %242 = dma.done %s235, 256
        $region44: #{tpu_custom_call.1} parent=39 // pred_fallthru
          _
        // Predicated region
        $region45: #{tpu_custom_call.1} parent=39 // pred_check
          %p243 = pneg %p65
        $region46: #{tpu_custom_call.1} parent=39 // pred_check_branch
          %245 = sbr.rel (%p243) target = $region48
        $region47: #{tpu_custom_call.1} parent=39 // pred_region
          %246 = dma.done [#allocation6], 2048
        $region48: #{tpu_custom_call.1} parent=39 // pred_fallthru
          _
        // Predicated region
        $region49: #{tpu_custom_call.1} parent=39 // pred_check
          %p247 = pneg %p107
        $region50: #{tpu_custom_call.1} parent=39 // pred_check_branch
          %249 = sbr.rel (%p247) target = $region52
        $region51: #{tpu_custom_call.1} parent=39 // pred_region
          %250 = dma.done [#allocation6], 2048
        $region52: #{tpu_custom_call.1} parent=39 // pred_fallthru
          _
        %s251 = sand.u32 %s31, 1
        %s252 = scalar_lea.sflag [#allocation3], %s251
        %s253 = sand.u32 %s31, 1
        %s254 = smul.addr %s253, 16
        %s255 = scalar_lea.vmem [#allocation2], %s254
        %p256 = pneg %p44
        %p257 = pneg %p41
        %p258 = pneg %p65
        %p259 = pneg %p62
        %p260 = pneg %p86
        %p261 = pneg %p83
        %p262 = pneg %p107
        %p263 = pneg %p104
        %p264 = pneg %p128
        %p265 = pneg %p125
        %p266 = pneg %p154
        %p267 = pneg %p151
        %s268 = sand.u32 %s141, 1
        %s269 = scalar_lea.sflag [#allocation4], %s268
        %s270 = sand.u32 %s141, 1
        %s271 = smul.addr %s270, 32
        %s272 = scalar_lea.vmem [#allocation8], %s271
        %s273 = smul.u32 2, %s23
        %s274 = smul.u32 2, %s23
        %v276 = vld [vmem:[%s238] sm:$0xff]
        %v277 = vld [vmem:[%s238 + $0x8] sm:$0xff]
        %v278 = vld [vmem:[#allocation5] sm:$0xf]
        %v279 = vld [vmem:[#allocation5 + $0x4] sm:$0xf]
        %v280 = vld [vmem:[#allocation5 + $0x8] sm:$0xf]
        %v281 = vld [vmem:[#allocation5 + $0xc] sm:$0xf]
        %v282 = vld [vmem:[#allocation5 + $0x10] sm:$0xf]
        %v283 = vld [vmem:[#allocation5 + $0x14] sm:$0xf]
        %v284 = vld [vmem:[#allocation5 + $0x18] sm:$0xf]
        %v285 = vld [vmem:[#allocation5 + $0x1c] sm:$0xf]
        %v286 = vld [vmem:[#allocation5 + $0x20] sm:$0xf]
        %v287 = vld [vmem:[#allocation5 + $0x24] sm:$0xf]
        %v288 = vld [vmem:[#allocation5 + $0x28] sm:$0xf]
        %v289 = vld [vmem:[#allocation5 + $0x2c] sm:$0xf]
        %v290 = vld [vmem:[#allocation5 + $0x30] sm:$0xf]
        %v291 = vld [vmem:[#allocation5 + $0x34] sm:$0xf]
        %v292 = vld [vmem:[#allocation5 + $0x38] sm:$0xf]
        %v293 = vld [vmem:[#allocation5 + $0x3c] sm:$0xf]
        %v294 = vld [vmem:[#allocation5 + $0x40] sm:$0xf]
        %v295 = vld [vmem:[#allocation5 + $0x44] sm:$0xf]
        %v296 = vld [vmem:[#allocation5 + $0x48] sm:$0xf]
        %v297 = vld [vmem:[#allocation5 + $0x4c] sm:$0xf]
        %v298 = vld [vmem:[#allocation5 + $0x50] sm:$0xf]
        %v299 = vld [vmem:[#allocation5 + $0x54] sm:$0xf]
        %v300 = vld [vmem:[#allocation5 + $0x58] sm:$0xf]
        %v301 = vld [vmem:[#allocation5 + $0x5c] sm:$0xf]
        %v302 = vld [vmem:[#allocation5 + $0x60] sm:$0xf]
        %v303 = vld [vmem:[#allocation5 + $0x64] sm:$0xf]
        %v304 = vld [vmem:[#allocation5 + $0x68] sm:$0xf]
        %v305 = vld [vmem:[#allocation5 + $0x6c] sm:$0xf]
        %v306 = vld [vmem:[#allocation5 + $0x70] sm:$0xf]
        %v307 = vld [vmem:[#allocation5 + $0x74] sm:$0xf]
        %v308 = vld [vmem:[#allocation5 + $0x78] sm:$0xf]
        %v309 = vld [vmem:[#allocation5 + $0x7c] sm:$0xf]
        %v310 = vld [vmem:[%s2] sm:$0x1]
        %v312 = vlaneseq
        %v313 = vshrl.u32 %v312, 7
        %v314 = vsub.s32 0, %v313
        %v315 = vrot.slane %v310, %v314
        %v319 = vunpack.c.l.b16 %v276
        %v320 = vunpack.c.h.b16 %v276
        %v321 = vunpack.c.l.b16 %v277
        %v322 = vunpack.c.h.b16 %v277
        %v323 = vpack.c.b16 %v321, %v319
        %v324 = vpack.c.b16 %v322, %v320
        %v359 = vunpack.c.l.b16 %v278
        %v360 = vunpack.c.l.b16 %v279
        %v361 = vunpack.c.l.b16 %v280
        %v362 = vunpack.c.l.b16 %v281
        %v363 = vunpack.c.l.b16 %v282
        %v364 = vunpack.c.l.b16 %v283
        %v365 = vunpack.c.l.b16 %v284
        %v366 = vunpack.c.l.b16 %v285
        %v367 = vunpack.c.l.b16 %v286
        %v368 = vunpack.c.l.b16 %v287
        %v369 = vunpack.c.l.b16 %v288
        %v370 = vunpack.c.l.b16 %v289
        %v371 = vunpack.c.l.b16 %v290
        %v372 = vunpack.c.l.b16 %v291
        %v373 = vunpack.c.l.b16 %v292
        %v374 = vunpack.c.l.b16 %v293
        %v375 = vunpack.c.l.b16 %v294
        %v376 = vunpack.c.l.b16 %v295
        %v377 = vunpack.c.l.b16 %v296
        %v378 = vunpack.c.l.b16 %v297
        %v379 = vunpack.c.l.b16 %v298
        %v380 = vunpack.c.l.b16 %v299
        %v381 = vunpack.c.l.b16 %v300
        %v382 = vunpack.c.l.b16 %v301
        %v383 = vunpack.c.l.b16 %v302
        %v384 = vunpack.c.l.b16 %v303
        %v385 = vunpack.c.l.b16 %v304
        %v386 = vunpack.c.l.b16 %v305
        %v387 = vunpack.c.l.b16 %v306
        %v388 = vunpack.c.l.b16 %v307
        %v389 = vunpack.c.l.b16 %v308
        %v390 = vunpack.c.l.b16 %v309
        %v391 = vpack.c.b16 %v360, %v359
        %v392 = vpack.c.b16 %v362, %v361
        %v393 = vpack.c.b16 %v364, %v363
        %v394 = vpack.c.b16 %v366, %v365
        %v395 = vpack.c.b16 %v368, %v367
        %v396 = vpack.c.b16 %v370, %v369
        %v397 = vpack.c.b16 %v372, %v371
        %v398 = vpack.c.b16 %v374, %v373
        %v399 = vpack.c.b16 %v376, %v375
        %v400 = vpack.c.b16 %v378, %v377
        %v401 = vpack.c.b16 %v380, %v379
        %v402 = vpack.c.b16 %v382, %v381
        %v403 = vpack.c.b16 %v384, %v383
        %v404 = vpack.c.b16 %v386, %v385
        %v405 = vpack.c.b16 %v388, %v387
        %v406 = vpack.c.b16 %v390, %v389
        %423 = vmatprep.subr.bf16.mxu0 0
        %424 = vmatpush1.bf16.msra.mxu0 %v398
        %425 = vmatprep.subr.bf16.mxu0 0
        %426 = vmatpush1.bf16.msra.mxu0 %v397
        %427 = vmatprep.subr.bf16.mxu0 0
        %428 = vmatpush1.bf16.msra.mxu0 %v396
        %429 = vmatprep.subr.bf16.mxu0 0
        %430 = vmatpush1.bf16.msra.mxu0 %v395
        %431 = vmatprep.subr.bf16.mxu0 0
        %432 = vmatpush1.bf16.msra.mxu0 %v394
        %433 = vmatprep.subr.bf16.mxu0 0
        %434 = vmatpush1.bf16.msra.mxu0 %v393
        %435 = vmatprep.subr.bf16.mxu0 0
        %436 = vmatpush1.bf16.msra.mxu0 %v392
        %437 = vmatprep.subr.bf16.mxu0 0
        %438 = vmatpush1.bf16.msra.mxu0 %v391
        %439 = vmatprep.subr.bf16.mxu0 0
        %440 = vmatpush2.bf16.msra.mxu0 %v406
        %441 = vmatprep.subr.bf16.mxu0 0
        %442 = vmatpush2.bf16.msra.mxu0 %v405
        %443 = vmatprep.subr.bf16.mxu0 0
        %444 = vmatpush2.bf16.msra.mxu0 %v404
        %445 = vmatprep.subr.bf16.mxu0 0
        %446 = vmatpush2.bf16.msra.mxu0 %v403
        %447 = vmatprep.subr.bf16.mxu0 0
        %448 = vmatpush2.bf16.msra.mxu0 %v402
        %449 = vmatprep.subr.bf16.mxu0 0
        %450 = vmatpush2.bf16.msra.mxu0 %v401
        %451 = vmatprep.subr.bf16.mxu0 0
        %452 = vmatpush2.bf16.msra.mxu0 %v400
        %453 = vmatprep.subr.bf16.mxu0 0
        %454 = vmatpush2.bf16.msra.mxu0 %v399
        %455 = vmatprep.mubr.bf16.mxu0 %v324
        %456 = vmatmul.mubr.bf16.gmra.mxu0 %v323
        %v457 = vpop.f32.mrf.mxu0
        %v458 = vadd.f32 %v315, %v457
        %v459 = vpop.f32.mrf.mxu0
        %v460 = vpop.f32.mrf.mxu0
        %v461 = vadd.f32 %v315, %v460
        %v462 = vpop.f32.mrf.mxu0
        %463 = vdwg.mxu0
        %v464 = vmax.f32 %v458, 0.0
        %v465 = vmax.f32 %v461, 0.0
        %v466 = vpack.c.bf16 %v465, %v464
        %v467 = vld [vmem:[#allocation7] sm:$0xff]
        %v468 = vld [vmem:[#allocation7 + $0x8] sm:$0xff]
        %v469 = vld [vmem:[#allocation7 + $0x10] sm:$0xff]
        %v470 = vld [vmem:[#allocation7 + $0x18] sm:$0xff]
        %v471 = vld [vmem:[#allocation7 + $0x20] sm:$0xff]
        %v472 = vld [vmem:[#allocation7 + $0x28] sm:$0xff]
        %v473 = vld [vmem:[#allocation7 + $0x30] sm:$0xff]
        %v474 = vld [vmem:[#allocation7 + $0x38] sm:$0xff]
        %v475 = vld [vmem:[#allocation7 + $0x40] sm:$0xff]
        %v476 = vld [vmem:[#allocation7 + $0x48] sm:$0xff]
        %v477 = vld [vmem:[#allocation7 + $0x50] sm:$0xff]
        %v478 = vld [vmem:[#allocation7 + $0x58] sm:$0xff]
        %v479 = vld [vmem:[#allocation7 + $0x60] sm:$0xff]
        %v480 = vld [vmem:[#allocation7 + $0x68] sm:$0xff]
        %v481 = vld [vmem:[#allocation7 + $0x70] sm:$0xff]
        %v482 = vld [vmem:[#allocation7 + $0x78] sm:$0xff]
        %v483 = vld [vmem:[%s4] sm:$0x3]
        %v485 = vlaneseq
        %v486 = vshrl.u32 %v485, 7
        %v487 = vsub.s32 0, %v486
        %v488 = vrot.slane %v483, %v487
        %v489 = vlaneseq
        %v490 = vshrl.u32 %v489, 7
        %v491 = vsub.s32 1, %v490
        %v492 = vrot.slane %v483, %v491
        %v511 = vunpack.c.l.b16 %v467
        %v512 = vunpack.c.h.b16 %v467
        %v513 = vunpack.c.l.b16 %v468
        %v514 = vunpack.c.h.b16 %v468
        %v515 = vunpack.c.l.b16 %v469
        %v516 = vunpack.c.h.b16 %v469
        %v517 = vunpack.c.l.b16 %v470
        %v518 = vunpack.c.h.b16 %v470
        %v519 = vunpack.c.l.b16 %v471
        %v520 = vunpack.c.h.b16 %v471
        %v521 = vunpack.c.l.b16 %v472
        %v522 = vunpack.c.h.b16 %v472
        %v523 = vunpack.c.l.b16 %v473
        %v524 = vunpack.c.h.b16 %v473
        %v525 = vunpack.c.l.b16 %v474
        %v526 = vunpack.c.h.b16 %v474
        %v527 = vunpack.c.l.b16 %v475
        %v528 = vunpack.c.h.b16 %v475
        %v529 = vunpack.c.l.b16 %v476
        %v530 = vunpack.c.h.b16 %v476
        %v531 = vunpack.c.l.b16 %v477
        %v532 = vunpack.c.h.b16 %v477
        %v533 = vunpack.c.l.b16 %v478
        %v534 = vunpack.c.h.b16 %v478
        %v535 = vunpack.c.l.b16 %v479
        %v536 = vunpack.c.h.b16 %v479
        %v537 = vunpack.c.l.b16 %v480
        %v538 = vunpack.c.h.b16 %v480
        %v539 = vunpack.c.l.b16 %v481
        %v540 = vunpack.c.h.b16 %v481
        %v541 = vunpack.c.l.b16 %v482
        %v542 = vunpack.c.h.b16 %v482
        %v543 = vpack.c.b16 %v513, %v511
        %v544 = vpack.c.b16 %v514, %v512
        %v545 = vpack.c.b16 %v517, %v515
        %v546 = vpack.c.b16 %v518, %v516
        %v547 = vpack.c.b16 %v521, %v519
        %v548 = vpack.c.b16 %v522, %v520
        %v549 = vpack.c.b16 %v525, %v523
        %v550 = vpack.c.b16 %v526, %v524
        %v551 = vpack.c.b16 %v529, %v527
        %v552 = vpack.c.b16 %v530, %v528
        %v553 = vpack.c.b16 %v533, %v531
        %v554 = vpack.c.b16 %v534, %v532
        %v555 = vpack.c.b16 %v537, %v535
        %v556 = vpack.c.b16 %v538, %v536
        %v557 = vpack.c.b16 %v541, %v539
        %v558 = vpack.c.b16 %v542, %v540
        %575 = vmatprep.subr.bf16.mxu0 %v558
        %576 = vmatpush1.bf16.msra.mxu0 %v557
        %577 = vmatprep.subr.bf16.mxu0 %v556
        %578 = vmatpush1.bf16.msra.mxu0 %v555
        %579 = vmatprep.subr.bf16.mxu0 %v554
        %580 = vmatpush1.bf16.msra.mxu0 %v553
        %581 = vmatprep.subr.bf16.mxu0 %v552
        %582 = vmatpush1.bf16.msra.mxu0 %v551
        %583 = vmatprep.subr.bf16.mxu0 %v550
        %584 = vmatpush1.bf16.msra.mxu0 %v549
        %585 = vmatprep.subr.bf16.mxu0 %v548
        %586 = vmatpush1.bf16.msra.mxu0 %v547
        %587 = vmatprep.subr.bf16.mxu0 %v546
        %588 = vmatpush1.bf16.msra.mxu0 %v545
        %589 = vmatprep.subr.bf16.mxu0 %v544
        %590 = vmatpush1.bf16.msra.mxu0 %v543
        %591 = vmatprep.subr.bf16.mxu0 0
        %592 = vmatpush2.bf16.msra.mxu0 0
        %593 = vmatprep.subr.bf16.mxu0 0
        %594 = vmatpush2.bf16.msra.mxu0 0
        %595 = vmatprep.subr.bf16.mxu0 0
        %596 = vmatpush2.bf16.msra.mxu0 0
        %597 = vmatprep.subr.bf16.mxu0 0
        %598 = vmatpush2.bf16.msra.mxu0 0
        %599 = vmatprep.subr.bf16.mxu0 0
        %600 = vmatpush2.bf16.msra.mxu0 0
        %601 = vmatprep.subr.bf16.mxu0 0
        %602 = vmatpush2.bf16.msra.mxu0 0
        %603 = vmatprep.subr.bf16.mxu0 0
        %604 = vmatpush2.bf16.msra.mxu0 0
        %605 = vmatprep.subr.bf16.mxu0 0
        %606 = vmatpush2.bf16.msra.mxu0 0
        %607 = vmatprep.mubr.bf16.mxu0 0
        %608 = vmatmul.mubr.bf16.gmra.mxu0 %v466
        %v609 = vpop.f32.mrf.mxu0
        %v610 = vadd.f32 %v488, %v609
        %v611 = vpop.f32.mrf.mxu0
        %v612 = vadd.f32 %v492, %v611
        %v613 = vpop.f32.mrf.mxu0
        %v614 = vadd.f32 %v488, %v613
        %v615 = vpop.f32.mrf.mxu0
        %v616 = vadd.f32 %v492, %v615
        %617 = vdwg.mxu0
        %618 = vst [vmem:[%s272] sm:$0xff] %v610
        %619 = vst [vmem:[%s272 + $0x8] sm:$0xff] %v612
        %620 = vst [vmem:[%s272 + $0x10] sm:$0xff] %v614
        %621 = vst [vmem:[%s272 + $0x18] sm:$0xff] %v616
        %s622 = sand.u32 %s141, 1
        %s623 = scalar_lea.sflag [#allocation4], %s622
        %s624 = sand.u32 %s141, 1
        %s625 = smul.addr %s624, 32
        %s626 = scalar_lea.vmem [#allocation8], %s625
        // Predicated region
        $region53: #{tpu_custom_call.1} parent=39 // pred_check
          %p627 = pneg %p151
        $region54: #{tpu_custom_call.1} parent=39 // pred_check_branch
          %629 = sbr.rel (%p627) target = $region56
        $region55: #{tpu_custom_call.1} parent=39 // pred_region
          %s630 = smul.u32 2, %s23
          %s632 = ssub.s32 512, 512
          %633 = vsyncadd %s623, %s632
          %s634 = smul.addr %s630, 2
          %s635 = smul.addr %s634, 128
          %s636 = scalar_lea.hbm %s5, %s635
          %s637 = sshll.u32 %s626, 4
          %s638 = int_to_ptr.vmem [resolvable:$true] %s637
          %643 = dma.vmem_to_hbm [thread:$0]  %s638, 512, %s636, %s623, 256, 256, 16
        $region56: #{tpu_custom_call.1} parent=39 // pred_fallthru
          _
      $region40: #{tpu_custom_call.1} parent=5 // pred_fallthru
        _
      %p644 = scmp.le.s32.totalorder 2, %s18
      // Predicated region
      $region57: #{tpu_custom_call.1} parent=5 // pred_check
        %p645 = pneg %p644
      $region58: #{tpu_custom_call.1} parent=5 // pred_check_branch
        %647 = sbr.rel (%p645) target = $region60
      $region59: #{tpu_custom_call.1} parent=5 // pred_region
        %s648 = ssub.s32 %s18, 2
        // Predicated region
        $region61: #{tpu_custom_call.1} parent=59 // pred_check
          %p649 = pneg %p157
        $region62: #{tpu_custom_call.1} parent=59 // pred_check_branch
          %651 = sbr.rel (%p649) target = $region64
        $region63: #{tpu_custom_call.1} parent=59 // pred_region
          %s652 = sand.u32 %s142, 1
          %s653 = scalar_lea.sflag [#allocation4], %s652
          %s654 = sand.u32 %s142, 1
          %s655 = smul.addr %s654, 32
          %s656 = scalar_lea.vmem [#allocation8], %s655
          %657 = dma.done %s653, 512
        $region64: #{tpu_custom_call.1} parent=59 // pred_fallthru
          _
      $region60: #{tpu_custom_call.1} parent=5 // pred_fallthru
        _
    $region6: #{tpu_custom_call.1} parent=1 // loop_footer
      %s22 = sadd.s32 1, %s18
    $region7: #{tpu_custom_call.1} parent=1 // loop_footer_branch
      %17 = sbr.rel target = $region3
    $region8: #{tpu_custom_call.1} parent=1 // loop_exit
      _
    %658 = vsyncpa [#allocation3], 1
    %s659 = scalar_lea.sflag [#allocation3], 1
    %660 = vsyncpa %s659, 1
    %661 = vsyncpa [#allocation6], 1
    %662 = vsyncpa [#allocation4], 1
    %s663 = scalar_lea.sflag [#allocation4], 1
    %664 = vsyncpa %s663, 1

</llo_original>
